<compile_context>
chip_gen: v7x
topology: tpu7x:2x2x1
jax: 0.10.0
libtpu: 0.0.40
codegen_flags: <defaults>
</compile_context>

<pallas_src>
import functools

import jax
import jax.numpy as jnp
from jax.experimental import pallas as pl
from jax.experimental.pallas import tpu as pltpu


LANE_WIDTH = 128  # padded feature/channel width (lane-dense layout)


# ----------------------------------------------------------------------------
# Pallas kernel: all GCN layers fused.
#   h = x ; for each layer: h = bn( (A@h) @ W + rowsum(A)*b ) [, relu]
# ----------------------------------------------------------------------------
def _gcn_fused_kernel(a_ref, x_ref, w_ref, p_ref, o_ref, *, num_layers, eps, inv_n):
    a_bf16 = a_ref[...]                                       # (N, N) bf16, VMEM-resident all layers
    # Rowsum (bias term of the reordered matmul) computed once, in f32.
    a_rowsum = jnp.sum(a_bf16.astype(jnp.float32), axis=1, keepdims=True)   # (N, 1)

    h = x_ref[...]                                            # (N, HP) f32 (already .float()-ed / padded)

    for layer in range(num_layers):                           # static unroll over 4 layers
        w = w_ref[layer]                                      # (HP, HP) bf16
        p = p_ref[layer]                                      # (8, HP) f32: rows 0/1/2 = bias/gamma/beta
        b = p[0:1, :]
        gamma = p[1:2, :]
        beta = p[2:3, :]

        # Aggregation-first order:  A @ (hW + b) == (A@h) @ W + rowsum(A) * b
        # bf16 MXU operands, f32 accumulation.
        ah = jnp.dot(a_bf16, h.astype(jnp.bfloat16),
                     preferred_element_type=jnp.float32)      # (N, HP) f32
        h = jnp.dot(ah.astype(jnp.bfloat16), w,
                    preferred_element_type=jnp.float32)       # (N, HP) f32
        h = h + a_rowsum * b

        # BatchNorm1d over nodes, training-mode (biased) stats — single-pass moments, all f32.
        mean = jnp.sum(h, axis=0, keepdims=True) * inv_n
        mean_sq = jnp.sum(h * h, axis=0, keepdims=True) * inv_n
        var = jnp.maximum(mean_sq - mean * mean, 0.0)
        scale = gamma * jax.lax.rsqrt(var + eps)              # (1, HP); rsqrt on EUP slot
        shift = beta - mean * scale                           # (1, HP)
        h = h * scale + shift                                 # one FMA per element

        if layer != num_layers - 1:
            h = jnp.maximum(h, 0.0)                           # ReLU on all but the last layer

    o_ref[...] = h                                            # lane-dense (N, 128) unmasked f32 store


def gcn_fused(a_hat_bf16, x_pad, w_stack_bf16, p_stack):
    """All GCNConv+BatchNorm(+ReLU) layers in one pallas_call; everything VMEM-resident."""
    n, hp = x_pad.shape
    num_layers = w_stack_bf16.shape[0]
    vmem = pl.BlockSpec(memory_space=pltpu.MemorySpace.VMEM)  # whole array in VMEM (tiny shapes)
    kernel = functools.partial(
        _gcn_fused_kernel, num_layers=num_layers, eps=1e-5, inv_n=1.0 / n
    )
    return pl.pallas_call(
        kernel,
        out_shape=jax.ShapeDtypeStruct((n, hp), jnp.float32),
        in_specs=[vmem, vmem, vmem, vmem],
        out_specs=vmem,
    )(a_hat_bf16, x_pad, w_stack_bf16, p_stack)


# ----------------------------------------------------------------------------
# Glue: dense normalized adjacency  A_hat = D^-1/2 (A + I) D^-1/2
# (matches PyG GCNConv gcn_norm with add_self_loops=True, edge_weight=1)
# ----------------------------------------------------------------------------
def build_normalized_adjacency(edge_index, num_nodes):
    src = edge_index[0]
    dst = edge_index[1]
    a = jnp.zeros((num_nodes, num_nodes), dtype=jnp.float32)
    a = a.at[dst, src].add(1.0)                               # A[t, s]: edge s -> t
    a = a + jnp.eye(num_nodes, dtype=jnp.float32)             # self-loops
    deg = jnp.sum(a, axis=1)
    d_inv_sqrt = jnp.where(deg > 0, jax.lax.rsqrt(deg), 0.0)
    return a * d_inv_sqrt[:, None] * d_inv_sqrt[None, :]


# ----------------------------------------------------------------------------
# Full GCN forward (pred=False -> returns node_representation of shape (N, hidden))
# ----------------------------------------------------------------------------
def gcn_forward(params, x, edge_index, batch):
    del batch  # unused when pred=False (as in the reference forward)
    num_nodes, num_features = x.shape
    hp = params["w_stack"].shape[-1]
    hidden_dim = params["hidden_dim"]

    a_hat = build_normalized_adjacency(edge_index, num_nodes).astype(jnp.bfloat16)

    # Zero-pad features to the lane width (padded channels stay exactly 0 everywhere).
    x_pad = jnp.zeros((num_nodes, hp), jnp.float32).at[:, :num_features].set(
        x.astype(jnp.float32)
    )

    h = gcn_fused(a_hat, x_pad, params["w_stack"], params["p_stack"])
    return h[:, :hidden_dim]                                  # node_representation (N, 32)


# ----------------------------------------------------------------------------
# Deterministic parameter init (4 GCNConv + 4 BatchNorm1d), packed & lane-padded.
#   w_stack: (L, 128, 128) bf16  real glorot block at [:fan_in, :hidden], zeros elsewhere
#   p_stack: (L, 8, 128)   f32   row 0 = conv bias (zeros), row 1 = bn gamma (ones on
#                                real channels), row 2 = bn beta (zeros); rows 3-7 padding.
# ----------------------------------------------------------------------------
def init_params(key, num_features, hidden_dim, num_layers, padded_dim=LANE_WIDTH):
    w_stack = jnp.zeros((num_layers, padded_dim, padded_dim), jnp.float32)
    p_stack = jnp.zeros((num_layers, 8, padded_dim), jnp.float32)
    for layer in range(num_layers):
        fan_in = num_features if layer == 0 else hidden_dim
        key, wkey = jax.random.split(key)
        limit = jnp.sqrt(6.0 / (fan_in + hidden_dim))         # glorot-uniform, like PyG
        w = jax.random.uniform(wkey, (fan_in, hidden_dim), jnp.float32, -limit, limit)
        w_stack = w_stack.at[layer, :fan_in, :hidden_dim].set(w)
        p_stack = p_stack.at[layer, 1, :hidden_dim].set(1.0)  # bn gamma = 1 on real channels
        # conv bias (row 0) and bn beta (row 2) stay at their zero init.
    return {
        "w_stack": w_stack.astype(jnp.bfloat16),              # bf16 MXU operands, half the DMA
        "p_stack": p_stack,                                   # BN/bias params stay f32
        "hidden_dim": hidden_dim,
        "num_features": num_features,
    }


if __name__ == "__main__":
    NUM_NODES = 16
    NUM_FEATURES = 8
    HIDDEN_DIM = 32
    NUM_LAYERS = 4

    key = jax.random.PRNGKey(0)
    key, xkey = jax.random.split(key)

    # Node features (N, F)
    x = jax.random.normal(xkey, (NUM_NODES, NUM_FEATURES), dtype=jnp.float32)

    # Small undirected ring graph: edges i <-> (i+1) % N
    fwd = jnp.arange(NUM_NODES, dtype=jnp.int32)
    nxt = (fwd + 1) % NUM_NODES
    edge_index = jnp.stack(
        [jnp.concatenate([fwd, nxt]), jnp.concatenate([nxt, fwd])], axis=0
    )  # (2, 2N)

    # batch vector (single graph) — accepted but unused since pred=False
    batch = jnp.zeros((NUM_NODES,), dtype=jnp.int32)

    params = init_params(key, NUM_FEATURES, HIDDEN_DIM, NUM_LAYERS)

    node_representation = gcn_forward(params, x, edge_index, batch)
    jax.block_until_ready(node_representation)

    assert node_representation.shape == (NUM_NODES, HIDDEN_DIM)
    assert node_representation.dtype == jnp.float32
    assert bool(jnp.all(jnp.isfinite(node_representation)))
    print("KERNEL_OK")
</pallas_src>

<mosaic_0001>
module attributes {stable_mosaic.version = 11 : i64} {
  func.func @_gcn_fused_kernel(%arg0: memref<16x16xbf16, #tpu.memory_space<vmem>>, %arg1: memref<16x128xf32, #tpu.memory_space<vmem>>, %arg2: memref<4x128x128xbf16, #tpu.memory_space<vmem>>, %arg3: memref<4x8x128xf32, #tpu.memory_space<vmem>>, %arg4: memref<16x128xf32, #tpu.memory_space<vmem>>) attributes {dimension_semantics = [], scalar_prefetch = 0 : i64, scratch_operands = 0 : i64, tpu.core_type = #tpu.core_type<tc>} {
    %c0 = arith.constant 0 : index
    %c0_0 = arith.constant 0 : index
    %0 = vector.load %arg0[%c0, %c0_0] : memref<16x16xbf16, #tpu.memory_space<vmem>>, vector<16x16xbf16>
    %1 = arith.extf %0 : vector<16x16xbf16> to vector<16x16xf32>
    %cst = arith.constant dense<0.000000e+00> : vector<16xf32>
    %2 = vector.multi_reduction <add>, %1, %cst [1] : vector<16x16xf32> to vector<16xf32>
    %3 = vector.shape_cast %2 : vector<16xf32> to vector<16x1xf32>
    %c0_1 = arith.constant 0 : index
    %c0_2 = arith.constant 0 : index
    %4 = vector.load %arg1[%c0_1, %c0_2] : memref<16x128xf32, #tpu.memory_space<vmem>>, vector<16x128xf32>
    %c0_3 = arith.constant 0 : index
    %c0_4 = arith.constant 0 : index
    %c0_5 = arith.constant 0 : index
    %5 = vector.load %arg2[%c0_3, %c0_4, %c0_5] : memref<4x128x128xbf16, #tpu.memory_space<vmem>>, vector<1x128x128xbf16>
    %6 = vector.shape_cast %5 : vector<1x128x128xbf16> to vector<128x128xbf16>
    %c0_6 = arith.constant 0 : index
    %c0_7 = arith.constant 0 : index
    %c0_8 = arith.constant 0 : index
    %7 = vector.load %arg3[%c0_6, %c0_7, %c0_8] : memref<4x8x128xf32, #tpu.memory_space<vmem>>, vector<1x8x128xf32>
    %8 = vector.shape_cast %7 : vector<1x8x128xf32> to vector<8x128xf32>
    %9 = vector.extract_strided_slice %8 {offsets = [0, 0], sizes = [1, 128], strides = [1, 1]} : vector<8x128xf32> to vector<1x128xf32>
    %10 = vector.extract_strided_slice %8 {offsets = [1, 0], sizes = [1, 128], strides = [1, 1]} : vector<8x128xf32> to vector<1x128xf32>
    %11 = vector.extract_strided_slice %8 {offsets = [2, 0], sizes = [1, 128], strides = [1, 1]} : vector<8x128xf32> to vector<1x128xf32>
    %12 = arith.truncf %4 : vector<16x128xf32> to vector<16x128xbf16>
    %cst_9 = arith.constant dense<0.000000e+00> : vector<16x128xf32>
    %13 = tpu.matmul %0, %12, %cst_9 {dimension_numbers = #tpu.dot_dimension_numbers<[1], [0], [0], [1], [0, 0, 1, 1], [], []>} : vector<16x16xbf16>, vector<16x128xbf16>, vector<16x128xf32> -> vector<16x128xf32>
    %14 = arith.truncf %13 : vector<16x128xf32> to vector<16x128xbf16>
    %cst_10 = arith.constant dense<0.000000e+00> : vector<16x128xf32>
    %15 = tpu.matmul %14, %6, %cst_10 {dimension_numbers = #tpu.dot_dimension_numbers<[1], [0], [0], [1], [0, 0, 1, 1], [], []>} : vector<16x128xbf16>, vector<128x128xbf16>, vector<16x128xf32> -> vector<16x128xf32>
    %16 = vector.broadcast %3 : vector<16x1xf32> to vector<16x128xf32>
    %17 = vector.broadcast %9 : vector<1x128xf32> to vector<16x128xf32>
    %18 = arith.mulf %16, %17 : vector<16x128xf32>
    %19 = arith.addf %15, %18 : vector<16x128xf32>
    %cst_11 = arith.constant dense<0.000000e+00> : vector<128xf32>
    %20 = vector.multi_reduction <add>, %19, %cst_11 [0] : vector<16x128xf32> to vector<128xf32>
    %21 = vector.shape_cast %20 : vector<128xf32> to vector<1x128xf32>
    %cst_12 = arith.constant 6.250000e-02 : f32
    %22 = vector.broadcast %cst_12 : f32 to vector<1x128xf32>
    %23 = arith.mulf %21, %22 : vector<1x128xf32>
    %24 = arith.mulf %19, %19 : vector<16x128xf32>
    %cst_13 = arith.constant dense<0.000000e+00> : vector<128xf32>
    %25 = vector.multi_reduction <add>, %24, %cst_13 [0] : vector<16x128xf32> to vector<128xf32>
    %26 = vector.shape_cast %25 : vector<128xf32> to vector<1x128xf32>
    %cst_14 = arith.constant 6.250000e-02 : f32
    %27 = vector.broadcast %cst_14 : f32 to vector<1x128xf32>
    %28 = arith.mulf %26, %27 : vector<1x128xf32>
    %29 = arith.mulf %23, %23 : vector<1x128xf32>
    %30 = arith.subf %28, %29 : vector<1x128xf32>
    %cst_15 = arith.constant 0.000000e+00 : f32
    %31 = vector.broadcast %cst_15 : f32 to vector<1x128xf32>
    %32 = arith.maximumf %30, %31 : vector<1x128xf32>
    %cst_16 = arith.constant 9.99999974E-6 : f32
    %33 = vector.broadcast %cst_16 : f32 to vector<1x128xf32>
    %34 = arith.addf %32, %33 : vector<1x128xf32>
    %35 = math.rsqrt %34 : vector<1x128xf32>
    %36 = arith.mulf %10, %35 : vector<1x128xf32>
    %37 = arith.mulf %23, %36 : vector<1x128xf32>
    %38 = arith.subf %11, %37 : vector<1x128xf32>
    %39 = vector.broadcast %36 : vector<1x128xf32> to vector<16x128xf32>
    %40 = arith.mulf %19, %39 : vector<16x128xf32>
    %41 = vector.broadcast %38 : vector<1x128xf32> to vector<16x128xf32>
    %42 = arith.addf %40, %41 : vector<16x128xf32>
    %cst_17 = arith.constant 0.000000e+00 : f32
    %43 = vector.broadcast %cst_17 : f32 to vector<16x128xf32>
    %44 = arith.maximumf %42, %43 : vector<16x128xf32>
    %c1 = arith.constant 1 : index
    %c0_18 = arith.constant 0 : index
    %c0_19 = arith.constant 0 : index
    %45 = vector.load %arg2[%c1, %c0_18, %c0_19] : memref<4x128x128xbf16, #tpu.memory_space<vmem>>, vector<1x128x128xbf16>
    %46 = vector.shape_cast %45 : vector<1x128x128xbf16> to vector<128x128xbf16>
    %c1_20 = arith.constant 1 : index
    %c0_21 = arith.constant 0 : index
    %c0_22 = arith.constant 0 : index
    %47 = vector.load %arg3[%c1_20, %c0_21, %c0_22] : memref<4x8x128xf32, #tpu.memory_space<vmem>>, vector<1x8x128xf32>
    %48 = vector.shape_cast %47 : vector<1x8x128xf32> to vector<8x128xf32>
    %49 = vector.extract_strided_slice %48 {offsets = [0, 0], sizes = [1, 128], strides = [1, 1]} : vector<8x128xf32> to vector<1x128xf32>
    %50 = vector.extract_strided_slice %48 {offsets = [1, 0], sizes = [1, 128], strides = [1, 1]} : vector<8x128xf32> to vector<1x128xf32>
    %51 = vector.extract_strided_slice %48 {offsets = [2, 0], sizes = [1, 128], strides = [1, 1]} : vector<8x128xf32> to vector<1x128xf32>
    %52 = arith.truncf %44 : vector<16x128xf32> to vector<16x128xbf16>
    %cst_23 = arith.constant dense<0.000000e+00> : vector<16x128xf32>
    %53 = tpu.matmul %0, %52, %cst_23 {dimension_numbers = #tpu.dot_dimension_numbers<[1], [0], [0], [1], [0, 0, 1, 1], [], []>} : vector<16x16xbf16>, vector<16x128xbf16>, vector<16x128xf32> -> vector<16x128xf32>
    %54 = arith.truncf %53 : vector<16x128xf32> to vector<16x128xbf16>
    %cst_24 = arith.constant dense<0.000000e+00> : vector<16x128xf32>
    %55 = tpu.matmul %54, %46, %cst_24 {dimension_numbers = #tpu.dot_dimension_numbers<[1], [0], [0], [1], [0, 0, 1, 1], [], []>} : vector<16x128xbf16>, vector<128x128xbf16>, vector<16x128xf32> -> vector<16x128xf32>
    %56 = vector.broadcast %3 : vector<16x1xf32> to vector<16x128xf32>
    %57 = vector.broadcast %49 : vector<1x128xf32> to vector<16x128xf32>
    %58 = arith.mulf %56, %57 : vector<16x128xf32>
    %59 = arith.addf %55, %58 : vector<16x128xf32>
    %cst_25 = arith.constant dense<0.000000e+00> : vector<128xf32>
    %60 = vector.multi_reduction <add>, %59, %cst_25 [0] : vector<16x128xf32> to vector<128xf32>
    %61 = vector.shape_cast %60 : vector<128xf32> to vector<1x128xf32>
    %cst_26 = arith.constant 6.250000e-02 : f32
    %62 = vector.broadcast %cst_26 : f32 to vector<1x128xf32>
    %63 = arith.mulf %61, %62 : vector<1x128xf32>
    %64 = arith.mulf %59, %59 : vector<16x128xf32>
    %cst_27 = arith.constant dense<0.000000e+00> : vector<128xf32>
    %65 = vector.multi_reduction <add>, %64, %cst_27 [0] : vector<16x128xf32> to vector<128xf32>
    %66 = vector.shape_cast %65 : vector<128xf32> to vector<1x128xf32>
    %cst_28 = arith.constant 6.250000e-02 : f32
    %67 = vector.broadcast %cst_28 : f32 to vector<1x128xf32>
    %68 = arith.mulf %66, %67 : vector<1x128xf32>
    %69 = arith.mulf %63, %63 : vector<1x128xf32>
    %70 = arith.subf %68, %69 : vector<1x128xf32>
    %cst_29 = arith.constant 0.000000e+00 : f32
    %71 = vector.broadcast %cst_29 : f32 to vector<1x128xf32>
    %72 = arith.maximumf %70, %71 : vector<1x128xf32>
    %cst_30 = arith.constant 9.99999974E-6 : f32
    %73 = vector.broadcast %cst_30 : f32 to vector<1x128xf32>
    %74 = arith.addf %72, %73 : vector<1x128xf32>
    %75 = math.rsqrt %74 : vector<1x128xf32>
    %76 = arith.mulf %50, %75 : vector<1x128xf32>
    %77 = arith.mulf %63, %76 : vector<1x128xf32>
    %78 = arith.subf %51, %77 : vector<1x128xf32>
    %79 = vector.broadcast %76 : vector<1x128xf32> to vector<16x128xf32>
    %80 = arith.mulf %59, %79 : vector<16x128xf32>
    %81 = vector.broadcast %78 : vector<1x128xf32> to vector<16x128xf32>
    %82 = arith.addf %80, %81 : vector<16x128xf32>
    %cst_31 = arith.constant 0.000000e+00 : f32
    %83 = vector.broadcast %cst_31 : f32 to vector<16x128xf32>
    %84 = arith.maximumf %82, %83 : vector<16x128xf32>
    %c2 = arith.constant 2 : index
    %c0_32 = arith.constant 0 : index
    %c0_33 = arith.constant 0 : index
    %85 = vector.load %arg2[%c2, %c0_32, %c0_33] : memref<4x128x128xbf16, #tpu.memory_space<vmem>>, vector<1x128x128xbf16>
    %86 = vector.shape_cast %85 : vector<1x128x128xbf16> to vector<128x128xbf16>
    %c2_34 = arith.constant 2 : index
    %c0_35 = arith.constant 0 : index
    %c0_36 = arith.constant 0 : index
    %87 = vector.load %arg3[%c2_34, %c0_35, %c0_36] : memref<4x8x128xf32, #tpu.memory_space<vmem>>, vector<1x8x128xf32>
    %88 = vector.shape_cast %87 : vector<1x8x128xf32> to vector<8x128xf32>
    %89 = vector.extract_strided_slice %88 {offsets = [0, 0], sizes = [1, 128], strides = [1, 1]} : vector<8x128xf32> to vector<1x128xf32>
    %90 = vector.extract_strided_slice %88 {offsets = [1, 0], sizes = [1, 128], strides = [1, 1]} : vector<8x128xf32> to vector<1x128xf32>
    %91 = vector.extract_strided_slice %88 {offsets = [2, 0], sizes = [1, 128], strides = [1, 1]} : vector<8x128xf32> to vector<1x128xf32>
    %92 = arith.truncf %84 : vector<16x128xf32> to vector<16x128xbf16>
    %cst_37 = arith.constant dense<0.000000e+00> : vector<16x128xf32>
    %93 = tpu.matmul %0, %92, %cst_37 {dimension_numbers = #tpu.dot_dimension_numbers<[1], [0], [0], [1], [0, 0, 1, 1], [], []>} : vector<16x16xbf16>, vector<16x128xbf16>, vector<16x128xf32> -> vector<16x128xf32>
    %94 = arith.truncf %93 : vector<16x128xf32> to vector<16x128xbf16>
    %cst_38 = arith.constant dense<0.000000e+00> : vector<16x128xf32>
    %95 = tpu.matmul %94, %86, %cst_38 {dimension_numbers = #tpu.dot_dimension_numbers<[1], [0], [0], [1], [0, 0, 1, 1], [], []>} : vector<16x128xbf16>, vector<128x128xbf16>, vector<16x128xf32> -> vector<16x128xf32>
    %96 = vector.broadcast %3 : vector<16x1xf32> to vector<16x128xf32>
    %97 = vector.broadcast %89 : vector<1x128xf32> to vector<16x128xf32>
    %98 = arith.mulf %96, %97 : vector<16x128xf32>
    %99 = arith.addf %95, %98 : vector<16x128xf32>
    %cst_39 = arith.constant dense<0.000000e+00> : vector<128xf32>
    %100 = vector.multi_reduction <add>, %99, %cst_39 [0] : vector<16x128xf32> to vector<128xf32>
    %101 = vector.shape_cast %100 : vector<128xf32> to vector<1x128xf32>
    %cst_40 = arith.constant 6.250000e-02 : f32
    %102 = vector.broadcast %cst_40 : f32 to vector<1x128xf32>
    %103 = arith.mulf %101, %102 : vector<1x128xf32>
    %104 = arith.mulf %99, %99 : vector<16x128xf32>
    %cst_41 = arith.constant dense<0.000000e+00> : vector<128xf32>
    %105 = vector.multi_reduction <add>, %104, %cst_41 [0] : vector<16x128xf32> to vector<128xf32>
    %106 = vector.shape_cast %105 : vector<128xf32> to vector<1x128xf32>
    %cst_42 = arith.constant 6.250000e-02 : f32
    %107 = vector.broadcast %cst_42 : f32 to vector<1x128xf32>
    %108 = arith.mulf %106, %107 : vector<1x128xf32>
    %109 = arith.mulf %103, %103 : vector<1x128xf32>
    %110 = arith.subf %108, %109 : vector<1x128xf32>
    %cst_43 = arith.constant 0.000000e+00 : f32
    %111 = vector.broadcast %cst_43 : f32 to vector<1x128xf32>
    %112 = arith.maximumf %110, %111 : vector<1x128xf32>
    %cst_44 = arith.constant 9.99999974E-6 : f32
    %113 = vector.broadcast %cst_44 : f32 to vector<1x128xf32>
    %114 = arith.addf %112, %113 : vector<1x128xf32>
    %115 = math.rsqrt %114 : vector<1x128xf32>
    %116 = arith.mulf %90, %115 : vector<1x128xf32>
    %117 = arith.mulf %103, %116 : vector<1x128xf32>
    %118 = arith.subf %91, %117 : vector<1x128xf32>
    %119 = vector.broadcast %116 : vector<1x128xf32> to vector<16x128xf32>
    %120 = arith.mulf %99, %119 : vector<16x128xf32>
    %121 = vector.broadcast %118 : vector<1x128xf32> to vector<16x128xf32>
    %122 = arith.addf %120, %121 : vector<16x128xf32>
    %cst_45 = arith.constant 0.000000e+00 : f32
    %123 = vector.broadcast %cst_45 : f32 to vector<16x128xf32>
    %124 = arith.maximumf %122, %123 : vector<16x128xf32>
    %c3 = arith.constant 3 : index
    %c0_46 = arith.constant 0 : index
    %c0_47 = arith.constant 0 : index
    %125 = vector.load %arg2[%c3, %c0_46, %c0_47] : memref<4x128x128xbf16, #tpu.memory_space<vmem>>, vector<1x128x128xbf16>
    %126 = vector.shape_cast %125 : vector<1x128x128xbf16> to vector<128x128xbf16>
    %c3_48 = arith.constant 3 : index
    %c0_49 = arith.constant 0 : index
    %c0_50 = arith.constant 0 : index
    %127 = vector.load %arg3[%c3_48, %c0_49, %c0_50] : memref<4x8x128xf32, #tpu.memory_space<vmem>>, vector<1x8x128xf32>
    %128 = vector.shape_cast %127 : vector<1x8x128xf32> to vector<8x128xf32>
    %129 = vector.extract_strided_slice %128 {offsets = [0, 0], sizes = [1, 128], strides = [1, 1]} : vector<8x128xf32> to vector<1x128xf32>
    %130 = vector.extract_strided_slice %128 {offsets = [1, 0], sizes = [1, 128], strides = [1, 1]} : vector<8x128xf32> to vector<1x128xf32>
    %131 = vector.extract_strided_slice %128 {offsets = [2, 0], sizes = [1, 128], strides = [1, 1]} : vector<8x128xf32> to vector<1x128xf32>
    %132 = arith.truncf %124 : vector<16x128xf32> to vector<16x128xbf16>
    %cst_51 = arith.constant dense<0.000000e+00> : vector<16x128xf32>
    %133 = tpu.matmul %0, %132, %cst_51 {dimension_numbers = #tpu.dot_dimension_numbers<[1], [0], [0], [1], [0, 0, 1, 1], [], []>} : vector<16x16xbf16>, vector<16x128xbf16>, vector<16x128xf32> -> vector<16x128xf32>
    %134 = arith.truncf %133 : vector<16x128xf32> to vector<16x128xbf16>
    %cst_52 = arith.constant dense<0.000000e+00> : vector<16x128xf32>
    %135 = tpu.matmul %134, %126, %cst_52 {dimension_numbers = #tpu.dot_dimension_numbers<[1], [0], [0], [1], [0, 0, 1, 1], [], []>} : vector<16x128xbf16>, vector<128x128xbf16>, vector<16x128xf32> -> vector<16x128xf32>
    %136 = vector.broadcast %3 : vector<16x1xf32> to vector<16x128xf32>
    %137 = vector.broadcast %129 : vector<1x128xf32> to vector<16x128xf32>
    %138 = arith.mulf %136, %137 : vector<16x128xf32>
    %139 = arith.addf %135, %138 : vector<16x128xf32>
    %cst_53 = arith.constant dense<0.000000e+00> : vector<128xf32>
    %140 = vector.multi_reduction <add>, %139, %cst_53 [0] : vector<16x128xf32> to vector<128xf32>
    %141 = vector.shape_cast %140 : vector<128xf32> to vector<1x128xf32>
    %cst_54 = arith.constant 6.250000e-02 : f32
    %142 = vector.broadcast %cst_54 : f32 to vector<1x128xf32>
    %143 = arith.mulf %141, %142 : vector<1x128xf32>
    %144 = arith.mulf %139, %139 : vector<16x128xf32>
    %cst_55 = arith.constant dense<0.000000e+00> : vector<128xf32>
    %145 = vector.multi_reduction <add>, %144, %cst_55 [0] : vector<16x128xf32> to vector<128xf32>
    %146 = vector.shape_cast %145 : vector<128xf32> to vector<1x128xf32>
    %cst_56 = arith.constant 6.250000e-02 : f32
    %147 = vector.broadcast %cst_56 : f32 to vector<1x128xf32>
    %148 = arith.mulf %146, %147 : vector<1x128xf32>
    %149 = arith.mulf %143, %143 : vector<1x128xf32>
    %150 = arith.subf %148, %149 : vector<1x128xf32>
    %cst_57 = arith.constant 0.000000e+00 : f32
    %151 = vector.broadcast %cst_57 : f32 to vector<1x128xf32>
    %152 = arith.maximumf %150, %151 : vector<1x128xf32>
    %cst_58 = arith.constant 9.99999974E-6 : f32
    %153 = vector.broadcast %cst_58 : f32 to vector<1x128xf32>
    %154 = arith.addf %152, %153 : vector<1x128xf32>
    %155 = math.rsqrt %154 : vector<1x128xf32>
    %156 = arith.mulf %130, %155 : vector<1x128xf32>
    %157 = arith.mulf %143, %156 : vector<1x128xf32>
    %158 = arith.subf %131, %157 : vector<1x128xf32>
    %159 = vector.broadcast %156 : vector<1x128xf32> to vector<16x128xf32>
    %160 = arith.mulf %139, %159 : vector<16x128xf32>
    %161 = vector.broadcast %158 : vector<1x128xf32> to vector<16x128xf32>
    %162 = arith.addf %160, %161 : vector<16x128xf32>
    %c0_59 = arith.constant 0 : index
    %c0_60 = arith.constant 0 : index
    %163 = vector.load %arg4[%c0_59, %c0_60] : memref<16x128xf32, #tpu.memory_space<vmem>>, vector<16x128xf32>
    tpu.vector_store %arg4[%c0_59, %c0_60], %162 {strides = array<i32>} : memref<16x128xf32, #tpu.memory_space<vmem>>, vector<16x128xf32>,
    return
  }
}

</mosaic_0001>

<llo_original>
// kernel: tpu_custom_call.1
$region0: #{tpu_custom_call.1}
  #allocation0 [shape = 'u32[]', space=smem, size = 0x4, offset = 0x4, fixed_abs, tag = 'smem constant byte address 0x4 - core index']
  #allocation1 [shape = 'u32[144,128]{1,0:T(1,128)}', space=vmem, size = 0x12000, scoped, tag = 'internal scratch']
  %s0 = inlined_call_operand.hbm [shape: bf16[16,16], index: 0, kind: input, shape index: {}]
  %s1 = inlined_call_operand.hbm [shape: f32[16,128], index: 1, kind: input, shape index: {}]
  %s2 = inlined_call_operand.hbm [shape: bf16[4,128,128], index: 2, kind: input, shape index: {}]
  %s3 = inlined_call_operand.hbm [shape: f32[4,8,128], index: 3, kind: input, shape index: {}]
  %s4 = inlined_call_operand.hbm [shape: f32[16,128], index: 4, kind: output, shape index: {}]
  %s5 = sld [smem:[#allocation0]]
  $region42: #{tpu_custom_call.1} parent=0
    _
  %s7 = ssub.s32 1, %s5
  %s8 = scalar_select 0, %s7, %s5
  $region1: #{tpu_custom_call.1} parent=0
    #allocation2 [shape = 'u8[4096]{0}', space=vmem, size = 0x1000, scoped, tag = 'input window, operand 0, single buffered']
    #allocation3 [shape = 's32[1]{0}', space=sflag, size = 0x4, scoped, tag = 'scoped memory for tpu_custom_call.1']
    #allocation4 [shape = 's32[1]{0}', space=sflag, size = 0x4, scoped, tag = 'scoped memory for tpu_custom_call.1']
    #allocation5 [shape = 'u8[8192]{0}', space=vmem, size = 0x2000, scoped, tag = 'input window, operand 1, single buffered']
    #allocation6 [shape = 's32[1]{0}', space=sflag, size = 0x4, scoped, tag = 'scoped memory for tpu_custom_call.1']
    #allocation7 [shape = 'u8[131072]{0}', space=vmem, size = 0x20000, scoped, tag = 'input window, operand 2, single buffered']
    #allocation8 [shape = 'u8[16384]{0}', space=vmem, size = 0x4000, scoped, tag = 'input window, operand 3, single buffered']
    #allocation9 [shape = 's32[1]{0}', space=sflag, size = 0x4, scoped, tag = 'scoped memory for tpu_custom_call.1']
    #allocation10 [shape = 'u8[8192]{0}', space=vmem, size = 0x2000, scoped, tag = 'output window, operand 0, single buffered']
    %9 = vsyncpa [#allocation3], 0
    %10 = vsyncpa [#allocation6], 0
    %11 = vsyncpa [#allocation9], 0
    %12 = vsyncpa [#allocation4], 0
    // Predicated region
    $region2: #{tpu_custom_call.1} parent=1 // pred_check
      _
    $region3: #{tpu_custom_call.1} parent=1 // pred_check_branch
      %14 = sbr.rel (0) target = $region5
    $region4: #{tpu_custom_call.1} parent=1 // pred_region
      %s16 = ssub.s32 128, 128
      %17 = vsyncadd [#allocation3], %s16
      %s18 = sshll.u32 [#allocation2], 4
      %s19 = int_to_ptr.vmem [resolvable:$true] %s18
      %24 = dma.hbm_to_vmem [thread:$0]  %s0, 128, %s19, [#allocation3], 64, 64, 4
    $region5: #{tpu_custom_call.1} parent=1 // pred_fallthru
      _
    // Predicated region
    $region6: #{tpu_custom_call.1} parent=1 // pred_check
      _
    $region7: #{tpu_custom_call.1} parent=1 // pred_check_branch
      %26 = sbr.rel (0) target = $region9
    $region8: #{tpu_custom_call.1} parent=1 // pred_region
      %s28 = ssub.s32 256, 256
      %29 = vsyncadd [#allocation6], %s28
      %s30 = sshll.u32 [#allocation5], 4
      %s31 = int_to_ptr.vmem [resolvable:$true] %s30
      %36 = dma.hbm_to_vmem [thread:$0]  %s1, 256, %s31, [#allocation6], 128, 128, 8
    $region9: #{tpu_custom_call.1} parent=1 // pred_fallthru
      _
    // Predicated region
    $region10: #{tpu_custom_call.1} parent=1 // pred_check
      _
    $region11: #{tpu_custom_call.1} parent=1 // pred_check_branch
      %38 = sbr.rel (0) target = $region13
    $region12: #{tpu_custom_call.1} parent=1 // pred_region
      %s40 = ssub.s32 4096, 4096
      %41 = vsyncadd [#allocation6], %s40
      %s42 = sshll.u32 [#allocation7], 4
      %s43 = int_to_ptr.vmem [resolvable:$true] %s42
      %48 = dma.hbm_to_vmem [thread:$0]  %s2, 4096, %s43, [#allocation6], 64, 64, 4
    $region13: #{tpu_custom_call.1} parent=1 // pred_fallthru
      _
    // Predicated region
    $region14: #{tpu_custom_call.1} parent=1 // pred_check
      _
    $region15: #{tpu_custom_call.1} parent=1 // pred_check_branch
      %50 = sbr.rel (0) target = $region17
    $region16: #{tpu_custom_call.1} parent=1 // pred_region
      %s52 = ssub.s32 512, 512
      %53 = vsyncadd [#allocation9], %s52
      %s54 = sshll.u32 [#allocation8], 4
      %s55 = int_to_ptr.vmem [resolvable:$true] %s54
      %60 = dma.hbm_to_vmem [thread:$0]  %s3, 512, %s55, [#allocation9], 128, 128, 8
    $region17: #{tpu_custom_call.1} parent=1 // pred_fallthru
      _
    // Predicated region
    $region18: #{tpu_custom_call.1} parent=1 // pred_check
      _
    $region19: #{tpu_custom_call.1} parent=1 // pred_check_branch
      %62 = sbr.rel (0) target = $region21
    $region20: #{tpu_custom_call.1} parent=1 // pred_region
      %63 = dma.done [#allocation3], 128
    $region21: #{tpu_custom_call.1} parent=1 // pred_fallthru
      _
    // Predicated region
    $region22: #{tpu_custom_call.1} parent=1 // pred_check
      _
    $region23: #{tpu_custom_call.1} parent=1 // pred_check_branch
      %65 = sbr.rel (0) target = $region25
    $region24: #{tpu_custom_call.1} parent=1 // pred_region
      %66 = dma.done [#allocation6], 256
    $region25: #{tpu_custom_call.1} parent=1 // pred_fallthru
      _
    // Predicated region
    $region26: #{tpu_custom_call.1} parent=1 // pred_check
      _
    $region27: #{tpu_custom_call.1} parent=1 // pred_check_branch
      %68 = sbr.rel (0) target = $region29
    $region28: #{tpu_custom_call.1} parent=1 // pred_region
      %69 = dma.done [#allocation6], 4096
    $region29: #{tpu_custom_call.1} parent=1 // pred_fallthru
      _
    // Predicated region
    $region30: #{tpu_custom_call.1} parent=1 // pred_check
      _
    $region31: #{tpu_custom_call.1} parent=1 // pred_check_branch
      %71 = sbr.rel (0) target = $region33
    $region32: #{tpu_custom_call.1} parent=1 // pred_region
      %72 = dma.done [#allocation9], 512
    $region33: #{tpu_custom_call.1} parent=1 // pred_fallthru
      _
    %v74 = vld [vmem:[#allocation2] sm:$0xf]
    %v75 = vld [vmem:[#allocation2 + $0x4] sm:$0xf]
    %v76 = vunpack.c.l.bf16 %v74
    %v77 = vunpack.c.l.bf16 %v75
    %vm78 = vcmask 130048
    %v79 = vsel %vm78, %v76, 0.0
    %80 = vadd.xlane.f32.xlu0 %v79
    %v81 = vpop.xlane.xlu0 %80
    %v82 = vsel %vm78, %v77, 0.0
    %83 = vadd.xlane.f32.xlu0 %v82
    %v84 = vpop.xlane.xlu0 %83
    %v85 = vld [vmem:[#allocation5] sm:$0xff]
    %v86 = vld [vmem:[#allocation5 + $0x8] sm:$0xff]
    %v87 = vld [vmem:[#allocation7] sm:$0xf]
    %v88 = vld [vmem:[#allocation7 + $0x4] sm:$0xf]
    %v89 = vld [vmem:[#allocation7 + $0x8] sm:$0xf]
    %v90 = vld [vmem:[#allocation7 + $0xc] sm:$0xf]
    %v91 = vld [vmem:[#allocation7 + $0x10] sm:$0xf]
    %v92 = vld [vmem:[#allocation7 + $0x14] sm:$0xf]
    %v93 = vld [vmem:[#allocation7 + $0x18] sm:$0xf]
    %v94 = vld [vmem:[#allocation7 + $0x1c] sm:$0xf]
    %v95 = vld [vmem:[#allocation7 + $0x20] sm:$0xf]
    %v96 = vld [vmem:[#allocation7 + $0x24] sm:$0xf]
    %v97 = vld [vmem:[#allocation7 + $0x28] sm:$0xf]
    %v98 = vld [vmem:[#allocation7 + $0x2c] sm:$0xf]
    %v99 = vld [vmem:[#allocation7 + $0x30] sm:$0xf]
    %v100 = vld [vmem:[#allocation7 + $0x34] sm:$0xf]
    %v101 = vld [vmem:[#allocation7 + $0x38] sm:$0xf]
    %v102 = vld [vmem:[#allocation7 + $0x3c] sm:$0xf]
    %v103 = vld [vmem:[#allocation8] sm:$0xff]
    %v104 = vpack.c.bf16 %v86, %v85
    %v107 = vunpack.c.l.b16 %v74
    %v108 = vunpack.c.l.b16 %v75
    %v109 = vpack.c.b16 %v108, %v107
    %v111 = vsel %vm78, %v109, 0
    %113 = vmatprep.subr.bf16.mxu0 0
    %114 = vmatpush1.bf16.msra.mxu0 %v104
    %115 = vmatprep.subr.bf16.mxu0 0
    %116 = vmatpush1.bf16.msra.mxu0 0
    %117 = vmatprep.subr.bf16.mxu0 0
    %118 = vmatpush1.bf16.msra.mxu0 0
    %119 = vmatprep.subr.bf16.mxu0 0
    %120 = vmatpush1.bf16.msra.mxu0 0
    %121 = vmatprep.subr.bf16.mxu0 0
    %122 = vmatpush1.bf16.msra.mxu0 0
    %123 = vmatprep.subr.bf16.mxu0 0
    %124 = vmatpush1.bf16.msra.mxu0 0
    %125 = vmatprep.subr.bf16.mxu0 0
    %126 = vmatpush1.bf16.msra.mxu0 0
    %127 = vmatprep.subr.bf16.mxu0 0
    %128 = vmatpush1.bf16.msra.mxu0 0
    %129 = vmatprep.subr.bf16.mxu0 0
    %130 = vmatpush1.bf16.msra.mxu0 0
    %131 = vmatprep.subr.bf16.mxu0 0
    %132 = vmatpush1.bf16.msra.mxu0 0
    %133 = vmatprep.subr.bf16.mxu0 0
    %134 = vmatpush1.bf16.msra.mxu0 0
    %135 = vmatprep.subr.bf16.mxu0 0
    %136 = vmatpush1.bf16.msra.mxu0 0
    %137 = vmatprep.subr.bf16.mxu0 0
    %138 = vmatpush1.bf16.msra.mxu0 0
    %139 = vmatprep.subr.bf16.mxu0 0
    %140 = vmatpush1.bf16.msra.mxu0 0
    %141 = vmatprep.subr.bf16.mxu0 0
    %142 = vmatpush1.bf16.msra.mxu0 0
    %143 = vmatprep.subr.bf16.mxu0 0
    %144 = vmatpush1.bf16.msra.mxu0 0
    %145 = vmatprep.mubr.bf16.mxu0 0
    %146 = vmatmul.mubr.bf16.gmra.mrb[0].mxu0 %v111
    %v147 = vpop.f32.mrb[0].mxu0
    %v148 = vadd.f32 0.0, %v147
    %v149 = vpop.f32.mrb[0].mxu0
    %v150 = vpop.f32.mrb[0].mxu0
    %v151 = vadd.f32 0.0, %v150
    %v152 = vpop.f32.mrb[0].mxu0
    %153 = vdwg.mxu0
    %v154 = vpack.c.bf16 %v151, %v148
    %v155 = vlaneseq
    %v156 = vshrl.u32 %v155, 7
    %v157 = vsub.s32 0, %v156
    %v158 = vrot.slane %v103, %v157
    %v159 = vmul.f32 %v81, %v158
    %v160 = vmul.f32 %v84, %v158
    %v177 = vunpack.c.l.b16 %v87
    %v178 = vunpack.c.l.b16 %v88
    %v179 = vunpack.c.l.b16 %v89
    %v180 = vunpack.c.l.b16 %v90
    %v181 = vunpack.c.l.b16 %v91
    %v182 = vunpack.c.l.b16 %v92
    %v183 = vunpack.c.l.b16 %v93
    %v184 = vunpack.c.l.b16 %v94
    %v185 = vunpack.c.l.b16 %v95
    %v186 = vunpack.c.l.b16 %v96
    %v187 = vunpack.c.l.b16 %v97
    %v188 = vunpack.c.l.b16 %v98
    %v189 = vunpack.c.l.b16 %v99
    %v190 = vunpack.c.l.b16 %v100
    %v191 = vunpack.c.l.b16 %v101
    %v192 = vunpack.c.l.b16 %v102
    %v193 = vpack.c.b16 %v178, %v177
    %v194 = vpack.c.b16 %v180, %v179
    %v195 = vpack.c.b16 %v182, %v181
    %v196 = vpack.c.b16 %v184, %v183
    %v197 = vpack.c.b16 %v186, %v185
    %v198 = vpack.c.b16 %v188, %v187
    %v199 = vpack.c.b16 %v190, %v189
    %v200 = vpack.c.b16 %v192, %v191
    %209 = vmatprep.subr.bf16.mxu0 0
    %210 = vmatpush1.bf16.msra.mxu0 %v193
    %211 = vmatprep.subr.bf16.mxu0 0
    %212 = vmatpush1.bf16.msra.mxu0 %v194
    %213 = vmatprep.subr.bf16.mxu0 0
    %214 = vmatpush1.bf16.msra.mxu0 %v195
    %215 = vmatprep.subr.bf16.mxu0 0
    %216 = vmatpush1.bf16.msra.mxu0 %v196
    %217 = vmatprep.subr.bf16.mxu0 0
    %218 = vmatpush1.bf16.msra.mxu0 %v197
    %219 = vmatprep.subr.bf16.mxu0 0
    %220 = vmatpush1.bf16.msra.mxu0 %v198
    %221 = vmatprep.subr.bf16.mxu0 0
    %222 = vmatpush1.bf16.msra.mxu0 %v199
    %223 = vmatprep.subr.bf16.mxu0 0
    %224 = vmatpush1.bf16.msra.mxu0 %v200
    %225 = vmatprep.subr.bf16.mxu0 0
    %226 = vmatpush1.bf16.msra.mxu0 0
    %227 = vmatprep.subr.bf16.mxu0 0
    %228 = vmatpush1.bf16.msra.mxu0 0
    %229 = vmatprep.subr.bf16.mxu0 0
    %230 = vmatpush1.bf16.msra.mxu0 0
    %231 = vmatprep.subr.bf16.mxu0 0
    %232 = vmatpush1.bf16.msra.mxu0 0
    %233 = vmatprep.subr.bf16.mxu0 0
    %234 = vmatpush1.bf16.msra.mxu0 0
    %235 = vmatprep.subr.bf16.mxu0 0
    %236 = vmatpush1.bf16.msra.mxu0 0
    %237 = vmatprep.subr.bf16.mxu0 0
    %238 = vmatpush1.bf16.msra.mxu0 0
    %239 = vmatprep.subr.bf16.mxu0 0
    %240 = vmatpush1.bf16.msra.mxu0 0
    %241 = vmatprep.mubr.bf16.mxu0 0
    %242 = vmatmul.mubr.bf16.gmra.mrb[0].mxu0 %v154
    %v243 = vpop.f32.mrb[0].mxu0
    %v244 = vadd.f32 %v159, %v243
    %v245 = vpop.f32.mrb[0].mxu0
    %v246 = vpop.f32.mrb[0].mxu0
    %v247 = vadd.f32 %v160, %v246
    %v248 = vpop.f32.mrb[0].mxu0
    %249 = vdwg.mxu0
    %v250 = vadd.f32 %v244, %v247
    %v251 = vrot.slane %v250, 4
    %v252 = vadd.f32 %v250, %v251
    %v253 = vrot.slane %v252, 2
    %v254 = vadd.f32 %v252, %v253
    %v255 = vrot.slane %v254, 1
    %v256 = vadd.f32 %v254, %v255
    %v257 = vmul.f32 %v256, 0.0625
    %v258 = vmul.f32 %v244, %v244
    %v259 = vmul.f32 %v247, %v247
    %v260 = vadd.f32 %v258, %v259
    %v261 = vrot.slane %v260, 4
    %v262 = vadd.f32 %v260, %v261
    %v263 = vrot.slane %v262, 2
    %v264 = vadd.f32 %v262, %v263
    %v265 = vrot.slane %v264, 1
    %v266 = vadd.f32 %v264, %v265
    %v267 = vmul.f32 %v266, 0.0625
    %v268 = vmul.f32 %v257, %v257
    %v269 = vsub.f32 %v267, %v268
    %v270 = vmax.f32 %v269, 0.0
    %v271 = vadd.f32 %v270, 1e-05
    %v272 = vrsqrt.pop %v271
    %v273 = vmul.f32 %v103, %v272
    %v274 = vmul.f32 %v257, %v273
    %v276 = vrot.slane %v274, 7
    %v278 = vsub.f32 %v103, %v276
    %v279 = vlaneseq
    %v280 = vshrl.u32 %v279, 7
    %v281 = vsub.s32 1, %v280
    %v282 = vrot.slane %v273, %v281
    %v283 = vmul.f32 %v244, %v282
    %v284 = vmul.f32 %v247, %v282
    %v285 = vlaneseq
    %v286 = vshrl.u32 %v285, 7
    %v287 = vsub.s32 2, %v286
    %v288 = vrot.slane %v278, %v287
    %v289 = vadd.f32 %v283, %v288
    %v290 = vadd.f32 %v284, %v288
    %v291 = vmax.f32 %v289, 0.0
    %v292 = vmax.f32 %v290, 0.0
    %s293 = scalar_lea.vmem [#allocation7], 64
    %v294 = vld [vmem:[%s293] sm:$0xf]
    %v295 = vld [vmem:[%s293 + $0x4] sm:$0xf]
    %v296 = vld [vmem:[%s293 + $0x8] sm:$0xf]
    %v297 = vld [vmem:[%s293 + $0xc] sm:$0xf]
    %v298 = vld [vmem:[%s293 + $0x10] sm:$0xf]
    %v299 = vld [vmem:[%s293 + $0x14] sm:$0xf]
    %v300 = vld [vmem:[%s293 + $0x18] sm:$0xf]
    %v301 = vld [vmem:[%s293 + $0x1c] sm:$0xf]
    %v302 = vld [vmem:[%s293 + $0x20] sm:$0xf]
    %v303 = vld [vmem:[%s293 + $0x24] sm:$0xf]
    %v304 = vld [vmem:[%s293 + $0x28] sm:$0xf]
    %v305 = vld [vmem:[%s293 + $0x2c] sm:$0xf]
    %v306 = vld [vmem:[%s293 + $0x30] sm:$0xf]
    %v307 = vld [vmem:[%s293 + $0x34] sm:$0xf]
    %v308 = vld [vmem:[%s293 + $0x38] sm:$0xf]
    %v309 = vld [vmem:[%s293 + $0x3c] sm:$0xf]
    %s310 = scalar_lea.vmem [#allocation8], 8
    %v311 = vld [vmem:[%s310] sm:$0xff]
    %v312 = vpack.c.bf16 %v292, %v291
    %313 = vmatprep.subr.bf16.mxu0 0
    %314 = vmatpush1.bf16.msra.mxu0 %v312
    %315 = vmatprep.subr.bf16.mxu0 0
    %316 = vmatpush1.bf16.msra.mxu0 0
    %317 = vmatprep.subr.bf16.mxu0 0
    %318 = vmatpush1.bf16.msra.mxu0 0
    %319 = vmatprep.subr.bf16.mxu0 0
    %320 = vmatpush1.bf16.msra.mxu0 0
    %321 = vmatprep.subr.bf16.mxu0 0
    %322 = vmatpush1.bf16.msra.mxu0 0
    %323 = vmatprep.subr.bf16.mxu0 0
    %324 = vmatpush1.bf16.msra.mxu0 0
    %325 = vmatprep.subr.bf16.mxu0 0
    %326 = vmatpush1.bf16.msra.mxu0 0
    %327 = vmatprep.subr.bf16.mxu0 0
    %328 = vmatpush1.bf16.msra.mxu0 0
    %329 = vmatprep.subr.bf16.mxu0 0
    %330 = vmatpush1.bf16.msra.mxu0 0
    %331 = vmatprep.subr.bf16.mxu0 0
    %332 = vmatpush1.bf16.msra.mxu0 0
    %333 = vmatprep.subr.bf16.mxu0 0
    %334 = vmatpush1.bf16.msra.mxu0 0
    %335 = vmatprep.subr.bf16.mxu0 0
    %336 = vmatpush1.bf16.msra.mxu0 0
    %337 = vmatprep.subr.bf16.mxu0 0
    %338 = vmatpush1.bf16.msra.mxu0 0
    %339 = vmatprep.subr.bf16.mxu0 0
    %340 = vmatpush1.bf16.msra.mxu0 0
    %341 = vmatprep.subr.bf16.mxu0 0
    %342 = vmatpush1.bf16.msra.mxu0 0
    %343 = vmatprep.subr.bf16.mxu0 0
    %344 = vmatpush1.bf16.msra.mxu0 0
    %345 = vmatprep.mubr.bf16.mxu0 0
    %346 = vmatmul.mubr.bf16.gmra.mrb[0].mxu0 %v111
    %v347 = vpop.f32.mrb[0].mxu0
    %v348 = vadd.f32 0.0, %v347
    %v349 = vpop.f32.mrb[0].mxu0
    %v350 = vpop.f32.mrb[0].mxu0
    %v351 = vadd.f32 0.0, %v350
    %v352 = vpop.f32.mrb[0].mxu0
    %353 = vdwg.mxu0
    %v354 = vpack.c.bf16 %v351, %v348
    %v355 = vlaneseq
    %v356 = vshrl.u32 %v355, 7
    %v357 = vsub.s32 0, %v356
    %v358 = vrot.slane %v311, %v357
    %v359 = vmul.f32 %v81, %v358
    %v360 = vmul.f32 %v84, %v358
    %v377 = vunpack.c.l.b16 %v294
    %v378 = vunpack.c.l.b16 %v295
    %v379 = vunpack.c.l.b16 %v296
    %v380 = vunpack.c.l.b16 %v297
    %v381 = vunpack.c.l.b16 %v298
    %v382 = vunpack.c.l.b16 %v299
    %v383 = vunpack.c.l.b16 %v300
    %v384 = vunpack.c.l.b16 %v301
    %v385 = vunpack.c.l.b16 %v302
    %v386 = vunpack.c.l.b16 %v303
    %v387 = vunpack.c.l.b16 %v304
    %v388 = vunpack.c.l.b16 %v305
    %v389 = vunpack.c.l.b16 %v306
    %v390 = vunpack.c.l.b16 %v307
    %v391 = vunpack.c.l.b16 %v308
    %v392 = vunpack.c.l.b16 %v309
    %v393 = vpack.c.b16 %v378, %v377
    %v394 = vpack.c.b16 %v380, %v379
    %v395 = vpack.c.b16 %v382, %v381
    %v396 = vpack.c.b16 %v384, %v383
    %v397 = vpack.c.b16 %v386, %v385
    %v398 = vpack.c.b16 %v388, %v387
    %v399 = vpack.c.b16 %v390, %v389
    %v400 = vpack.c.b16 %v392, %v391
    %409 = vmatprep.subr.bf16.mxu0 0
    %410 = vmatpush1.bf16.msra.mxu0 %v393
    %411 = vmatprep.subr.bf16.mxu0 0
    %412 = vmatpush1.bf16.msra.mxu0 %v394
    %413 = vmatprep.subr.bf16.mxu0 0
    %414 = vmatpush1.bf16.msra.mxu0 %v395
    %415 = vmatprep.subr.bf16.mxu0 0
    %416 = vmatpush1.bf16.msra.mxu0 %v396
    %417 = vmatprep.subr.bf16.mxu0 0
    %418 = vmatpush1.bf16.msra.mxu0 %v397
    %419 = vmatprep.subr.bf16.mxu0 0
    %420 = vmatpush1.bf16.msra.mxu0 %v398
    %421 = vmatprep.subr.bf16.mxu0 0
    %422 = vmatpush1.bf16.msra.mxu0 %v399
    %423 = vmatprep.subr.bf16.mxu0 0
    %424 = vmatpush1.bf16.msra.mxu0 %v400
    %425 = vmatprep.subr.bf16.mxu0 0
    %426 = vmatpush1.bf16.msra.mxu0 0
    %427 = vmatprep.subr.bf16.mxu0 0
    %428 = vmatpush1.bf16.msra.mxu0 0
    %429 = vmatprep.subr.bf16.mxu0 0
    %430 = vmatpush1.bf16.msra.mxu0 0
    %431 = vmatprep.subr.bf16.mxu0 0
    %432 = vmatpush1.bf16.msra.mxu0 0
    %433 = vmatprep.subr.bf16.mxu0 0
    %434 = vmatpush1.bf16.msra.mxu0 0
    %435 = vmatprep.subr.bf16.mxu0 0
    %436 = vmatpush1.bf16.msra.mxu0 0
    %437 = vmatprep.subr.bf16.mxu0 0
    %438 = vmatpush1.bf16.msra.mxu0 0
    %439 = vmatprep.subr.bf16.mxu0 0
    %440 = vmatpush1.bf16.msra.mxu0 0
    %441 = vmatprep.mubr.bf16.mxu0 0
    %442 = vmatmul.mubr.bf16.gmra.mrb[0].mxu0 %v354
    %v443 = vpop.f32.mrb[0].mxu0
    %v444 = vadd.f32 %v359, %v443
    %v445 = vpop.f32.mrb[0].mxu0
    %v446 = vpop.f32.mrb[0].mxu0
    %v447 = vadd.f32 %v360, %v446
    %v448 = vpop.f32.mrb[0].mxu0
    %449 = vdwg.mxu0
    %v450 = vadd.f32 %v444, %v447
    %v451 = vrot.slane %v450, 4
    %v452 = vadd.f32 %v450, %v451
    %v453 = vrot.slane %v452, 2
    %v454 = vadd.f32 %v452, %v453
    %v455 = vrot.slane %v454, 1
    %v456 = vadd.f32 %v454, %v455
    %v457 = vmul.f32 %v456, 0.0625
    %v458 = vmul.f32 %v444, %v444
    %v459 = vmul.f32 %v447, %v447
    %v460 = vadd.f32 %v458, %v459
    %v461 = vrot.slane %v460, 4
    %v462 = vadd.f32 %v460, %v461
    %v463 = vrot.slane %v462, 2
    %v464 = vadd.f32 %v462, %v463
    %v465 = vrot.slane %v464, 1
    %v466 = vadd.f32 %v464, %v465
    %v467 = vmul.f32 %v466, 0.0625
    %v468 = vmul.f32 %v457, %v457
    %v469 = vsub.f32 %v467, %v468
    %v470 = vmax.f32 %v469, 0.0
    %v471 = vadd.f32 %v470, 1e-05
    %v472 = vrsqrt.pop %v471
    %v473 = vmul.f32 %v311, %v472
    %v474 = vmul.f32 %v457, %v473
    %v476 = vrot.slane %v474, 7
    %v478 = vsub.f32 %v311, %v476
    %v479 = vlaneseq
    %v480 = vshrl.u32 %v479, 7
    %v481 = vsub.s32 1, %v480
    %v482 = vrot.slane %v473, %v481
    %v483 = vmul.f32 %v444, %v482
    %v484 = vmul.f32 %v447, %v482
    %v485 = vlaneseq
    %v486 = vshrl.u32 %v485, 7
    %v487 = vsub.s32 2, %v486
    %v488 = vrot.slane %v478, %v487
    %v489 = vadd.f32 %v483, %v488
    %v490 = vadd.f32 %v484, %v488
    %v491 = vmax.f32 %v489, 0.0
    %v492 = vmax.f32 %v490, 0.0
    %s493 = scalar_lea.vmem [#allocation7], 128
    %v494 = vld [vmem:[%s493] sm:$0xf]
    %v495 = vld [vmem:[%s493 + $0x4] sm:$0xf]
    %v496 = vld [vmem:[%s493 + $0x8] sm:$0xf]
    %v497 = vld [vmem:[%s493 + $0xc] sm:$0xf]
    %v498 = vld [vmem:[%s493 + $0x10] sm:$0xf]
    %v499 = vld [vmem:[%s493 + $0x14] sm:$0xf]
    %v500 = vld [vmem:[%s493 + $0x18] sm:$0xf]
    %v501 = vld [vmem:[%s493 + $0x1c] sm:$0xf]
    %v502 = vld [vmem:[%s493 + $0x20] sm:$0xf]
    %v503 = vld [vmem:[%s493 + $0x24] sm:$0xf]
    %v504 = vld [vmem:[%s493 + $0x28] sm:$0xf]
    %v505 = vld [vmem:[%s493 + $0x2c] sm:$0xf]
    %v506 = vld [vmem:[%s493 + $0x30] sm:$0xf]
    %v507 = vld [vmem:[%s493 + $0x34] sm:$0xf]
    %v508 = vld [vmem:[%s493 + $0x38] sm:$0xf]
    %v509 = vld [vmem:[%s493 + $0x3c] sm:$0xf]
    %s510 = scalar_lea.vmem [#allocation8], 16
    %v511 = vld [vmem:[%s510] sm:$0xff]
    %v512 = vpack.c.bf16 %v492, %v491
    %513 = vmatprep.subr.bf16.mxu0 0
    %514 = vmatpush1.bf16.msra.mxu0 %v512
    %515 = vmatprep.subr.bf16.mxu0 0
    %516 = vmatpush1.bf16.msra.mxu0 0
    %517 = vmatprep.subr.bf16.mxu0 0
    %518 = vmatpush1.bf16.msra.mxu0 0
    %519 = vmatprep.subr.bf16.mxu0 0
    %520 = vmatpush1.bf16.msra.mxu0 0
    %521 = vmatprep.subr.bf16.mxu0 0
    %522 = vmatpush1.bf16.msra.mxu0 0
    %523 = vmatprep.subr.bf16.mxu0 0
    %524 = vmatpush1.bf16.msra.mxu0 0
    %525 = vmatprep.subr.bf16.mxu0 0
    %526 = vmatpush1.bf16.msra.mxu0 0
    %527 = vmatprep.subr.bf16.mxu0 0
    %528 = vmatpush1.bf16.msra.mxu0 0
    %529 = vmatprep.subr.bf16.mxu0 0
    %530 = vmatpush1.bf16.msra.mxu0 0
    %531 = vmatprep.subr.bf16.mxu0 0
    %532 = vmatpush1.bf16.msra.mxu0 0
    %533 = vmatprep.subr.bf16.mxu0 0
    %534 = vmatpush1.bf16.msra.mxu0 0
    %535 = vmatprep.subr.bf16.mxu0 0
    %536 = vmatpush1.bf16.msra.mxu0 0
    %537 = vmatprep.subr.bf16.mxu0 0
    %538 = vmatpush1.bf16.msra.mxu0 0
    %539 = vmatprep.subr.bf16.mxu0 0
    %540 = vmatpush1.bf16.msra.mxu0 0
    %541 = vmatprep.subr.bf16.mxu0 0
    %542 = vmatpush1.bf16.msra.mxu0 0
    %543 = vmatprep.subr.bf16.mxu0 0
    %544 = vmatpush1.bf16.msra.mxu0 0
    %545 = vmatprep.mubr.bf16.mxu0 0
    %546 = vmatmul.mubr.bf16.gmra.mrb[0].mxu0 %v111
    %v547 = vpop.f32.mrb[0].mxu0
    %v548 = vadd.f32 0.0, %v547
    %v549 = vpop.f32.mrb[0].mxu0
    %v550 = vpop.f32.mrb[0].mxu0
    %v551 = vadd.f32 0.0, %v550
    %v552 = vpop.f32.mrb[0].mxu0
    %553 = vdwg.mxu0
    %v554 = vpack.c.bf16 %v551, %v548
    %v555 = vlaneseq
    %v556 = vshrl.u32 %v555, 7
    %v557 = vsub.s32 0, %v556
    %v558 = vrot.slane %v511, %v557
    %v559 = vmul.f32 %v81, %v558
    %v560 = vmul.f32 %v84, %v558
    %v577 = vunpack.c.l.b16 %v494
    %v578 = vunpack.c.l.b16 %v495
    %v579 = vunpack.c.l.b16 %v496
    %v580 = vunpack.c.l.b16 %v497
    %v581 = vunpack.c.l.b16 %v498
    %v582 = vunpack.c.l.b16 %v499
    %v583 = vunpack.c.l.b16 %v500
    %v584 = vunpack.c.l.b16 %v501
    %v585 = vunpack.c.l.b16 %v502
    %v586 = vunpack.c.l.b16 %v503
    %v587 = vunpack.c.l.b16 %v504
    %v588 = vunpack.c.l.b16 %v505
    %v589 = vunpack.c.l.b16 %v506
    %v590 = vunpack.c.l.b16 %v507
    %v591 = vunpack.c.l.b16 %v508
    %v592 = vunpack.c.l.b16 %v509
    %v593 = vpack.c.b16 %v578, %v577
    %v594 = vpack.c.b16 %v580, %v579
    %v595 = vpack.c.b16 %v582, %v581
    %v596 = vpack.c.b16 %v584, %v583
    %v597 = vpack.c.b16 %v586, %v585
    %v598 = vpack.c.b16 %v588, %v587
    %v599 = vpack.c.b16 %v590, %v589
    %v600 = vpack.c.b16 %v592, %v591
    %609 = vmatprep.subr.bf16.mxu0 0
    %610 = vmatpush1.bf16.msra.mxu0 %v593
    %611 = vmatprep.subr.bf16.mxu0 0
    %612 = vmatpush1.bf16.msra.mxu0 %v594
    %613 = vmatprep.subr.bf16.mxu0 0
    %614 = vmatpush1.bf16.msra.mxu0 %v595
    %615 = vmatprep.subr.bf16.mxu0 0
    %616 = vmatpush1.bf16.msra.mxu0 %v596
    %617 = vmatprep.subr.bf16.mxu0 0
    %618 = vmatpush1.bf16.msra.mxu0 %v597
    %619 = vmatprep.subr.bf16.mxu0 0
    %620 = vmatpush1.bf16.msra.mxu0 %v598
    %621 = vmatprep.subr.bf16.mxu0 0
    %622 = vmatpush1.bf16.msra.mxu0 %v599
    %623 = vmatprep.subr.bf16.mxu0 0
    %624 = vmatpush1.bf16.msra.mxu0 %v600
    %625 = vmatprep.subr.bf16.mxu0 0
    %626 = vmatpush1.bf16.msra.mxu0 0
    %627 = vmatprep.subr.bf16.mxu0 0
    %628 = vmatpush1.bf16.msra.mxu0 0
    %629 = vmatprep.subr.bf16.mxu0 0
    %630 = vmatpush1.bf16.msra.mxu0 0
    %631 = vmatprep.subr.bf16.mxu0 0
    %632 = vmatpush1.bf16.msra.mxu0 0
    %633 = vmatprep.subr.bf16.mxu0 0
    %634 = vmatpush1.bf16.msra.mxu0 0
    %635 = vmatprep.subr.bf16.mxu0 0
    %636 = vmatpush1.bf16.msra.mxu0 0
    %637 = vmatprep.subr.bf16.mxu0 0
    %638 = vmatpush1.bf16.msra.mxu0 0
    %639 = vmatprep.subr.bf16.mxu0 0
    %640 = vmatpush1.bf16.msra.mxu0 0
    %641 = vmatprep.mubr.bf16.mxu0 0
    %642 = vmatmul.mubr.bf16.gmra.mrb[0].mxu0 %v554
    %v643 = vpop.f32.mrb[0].mxu0
    %v644 = vadd.f32 %v559, %v643
    %v645 = vpop.f32.mrb[0].mxu0
    %v646 = vpop.f32.mrb[0].mxu0
    %v647 = vadd.f32 %v560, %v646
    %v648 = vpop.f32.mrb[0].mxu0
    %649 = vdwg.mxu0
    %v650 = vadd.f32 %v644, %v647
    %v651 = vrot.slane %v650, 4
    %v652 = vadd.f32 %v650, %v651
    %v653 = vrot.slane %v652, 2
    %v654 = vadd.f32 %v652, %v653
    %v655 = vrot.slane %v654, 1
    %v656 = vadd.f32 %v654, %v655
    %v657 = vmul.f32 %v656, 0.0625
    %v658 = vmul.f32 %v644, %v644
    %v659 = vmul.f32 %v647, %v647
    %v660 = vadd.f32 %v658, %v659
    %v661 = vrot.slane %v660, 4
    %v662 = vadd.f32 %v660, %v661
    %v663 = vrot.slane %v662, 2
    %v664 = vadd.f32 %v662, %v663
    %v665 = vrot.slane %v664, 1
    %v666 = vadd.f32 %v664, %v665
    %v667 = vmul.f32 %v666, 0.0625
    %v668 = vmul.f32 %v657, %v657
    %v669 = vsub.f32 %v667, %v668
    %v670 = vmax.f32 %v669, 0.0
    %v671 = vadd.f32 %v670, 1e-05
    %v672 = vrsqrt.pop %v671
    %v673 = vmul.f32 %v511, %v672
    %v674 = vmul.f32 %v657, %v673
    %v676 = vrot.slane %v674, 7
    %v678 = vsub.f32 %v511, %v676
    %v679 = vlaneseq
    %v680 = vshrl.u32 %v679, 7
    %v681 = vsub.s32 1, %v680
    %v682 = vrot.slane %v673, %v681
    %v683 = vmul.f32 %v644, %v682
    %v684 = vmul.f32 %v647, %v682
    %v685 = vlaneseq
    %v686 = vshrl.u32 %v685, 7
    %v687 = vsub.s32 2, %v686
    %v688 = vrot.slane %v678, %v687
    %v689 = vadd.f32 %v683, %v688
    %v690 = vadd.f32 %v684, %v688
    %v691 = vmax.f32 %v689, 0.0
    %v692 = vmax.f32 %v690, 0.0
    %s693 = scalar_lea.vmem [#allocation7], 192
    %v694 = vld [vmem:[%s693] sm:$0xf]
    %v695 = vld [vmem:[%s693 + $0x4] sm:$0xf]
    %v696 = vld [vmem:[%s693 + $0x8] sm:$0xf]
    %v697 = vld [vmem:[%s693 + $0xc] sm:$0xf]
    %v698 = vld [vmem:[%s693 + $0x10] sm:$0xf]
    %v699 = vld [vmem:[%s693 + $0x14] sm:$0xf]
    %v700 = vld [vmem:[%s693 + $0x18] sm:$0xf]
    %v701 = vld [vmem:[%s693 + $0x1c] sm:$0xf]
    %v702 = vld [vmem:[%s693 + $0x20] sm:$0xf]
    %v703 = vld [vmem:[%s693 + $0x24] sm:$0xf]
    %v704 = vld [vmem:[%s693 + $0x28] sm:$0xf]
    %v705 = vld [vmem:[%s693 + $0x2c] sm:$0xf]
    %v706 = vld [vmem:[%s693 + $0x30] sm:$0xf]
    %v707 = vld [vmem:[%s693 + $0x34] sm:$0xf]
    %v708 = vld [vmem:[%s693 + $0x38] sm:$0xf]
    %v709 = vld [vmem:[%s693 + $0x3c] sm:$0xf]
    %s710 = scalar_lea.vmem [#allocation8], 24
    %v711 = vld [vmem:[%s710] sm:$0xff]
    %v712 = vpack.c.bf16 %v692, %v691
    %713 = vmatprep.subr.bf16.mxu0 0
    %714 = vmatpush1.bf16.msra.mxu0 %v712
    %715 = vmatprep.subr.bf16.mxu0 0
    %716 = vmatpush1.bf16.msra.mxu0 0
    %717 = vmatprep.subr.bf16.mxu0 0
    %718 = vmatpush1.bf16.msra.mxu0 0
    %719 = vmatprep.subr.bf16.mxu0 0
    %720 = vmatpush1.bf16.msra.mxu0 0
    %721 = vmatprep.subr.bf16.mxu0 0
    %722 = vmatpush1.bf16.msra.mxu0 0
    %723 = vmatprep.subr.bf16.mxu0 0
    %724 = vmatpush1.bf16.msra.mxu0 0
    %725 = vmatprep.subr.bf16.mxu0 0
    %726 = vmatpush1.bf16.msra.mxu0 0
    %727 = vmatprep.subr.bf16.mxu0 0
    %728 = vmatpush1.bf16.msra.mxu0 0
    %729 = vmatprep.subr.bf16.mxu0 0
    %730 = vmatpush1.bf16.msra.mxu0 0
    %731 = vmatprep.subr.bf16.mxu0 0
    %732 = vmatpush1.bf16.msra.mxu0 0
    %733 = vmatprep.subr.bf16.mxu0 0
    %734 = vmatpush1.bf16.msra.mxu0 0
    %735 = vmatprep.subr.bf16.mxu0 0
    %736 = vmatpush1.bf16.msra.mxu0 0
    %737 = vmatprep.subr.bf16.mxu0 0
    %738 = vmatpush1.bf16.msra.mxu0 0
    %739 = vmatprep.subr.bf16.mxu0 0
    %740 = vmatpush1.bf16.msra.mxu0 0
    %741 = vmatprep.subr.bf16.mxu0 0
    %742 = vmatpush1.bf16.msra.mxu0 0
    %743 = vmatprep.subr.bf16.mxu0 0
    %744 = vmatpush1.bf16.msra.mxu0 0
    %745 = vmatprep.mubr.bf16.mxu0 0
    %746 = vmatmul.mubr.bf16.gmra.mrb[0].mxu0 %v111
    %v747 = vpop.f32.mrb[0].mxu0
    %v748 = vadd.f32 0.0, %v747
    %v749 = vpop.f32.mrb[0].mxu0
    %v750 = vpop.f32.mrb[0].mxu0
    %v751 = vadd.f32 0.0, %v750
    %v752 = vpop.f32.mrb[0].mxu0
    %753 = vdwg.mxu0
    %v754 = vpack.c.bf16 %v751, %v748
    %v755 = vlaneseq
    %v756 = vshrl.u32 %v755, 7
    %v757 = vsub.s32 0, %v756
    %v758 = vrot.slane %v711, %v757
    %v759 = vmul.f32 %v81, %v758
    %v760 = vmul.f32 %v84, %v758
    %v777 = vunpack.c.l.b16 %v694
    %v778 = vunpack.c.l.b16 %v695
    %v779 = vunpack.c.l.b16 %v696
    %v780 = vunpack.c.l.b16 %v697
    %v781 = vunpack.c.l.b16 %v698
    %v782 = vunpack.c.l.b16 %v699
    %v783 = vunpack.c.l.b16 %v700
    %v784 = vunpack.c.l.b16 %v701
    %v785 = vunpack.c.l.b16 %v702
    %v786 = vunpack.c.l.b16 %v703
    %v787 = vunpack.c.l.b16 %v704
    %v788 = vunpack.c.l.b16 %v705
    %v789 = vunpack.c.l.b16 %v706
    %v790 = vunpack.c.l.b16 %v707
    %v791 = vunpack.c.l.b16 %v708
    %v792 = vunpack.c.l.b16 %v709
    %v793 = vpack.c.b16 %v778, %v777
    %v794 = vpack.c.b16 %v780, %v779
    %v795 = vpack.c.b16 %v782, %v781
    %v796 = vpack.c.b16 %v784, %v783
    %v797 = vpack.c.b16 %v786, %v785
    %v798 = vpack.c.b16 %v788, %v787
    %v799 = vpack.c.b16 %v790, %v789
    %v800 = vpack.c.b16 %v792, %v791
    %809 = vmatprep.subr.bf16.mxu0 0
    %810 = vmatpush1.bf16.msra.mxu0 %v793
    %811 = vmatprep.subr.bf16.mxu0 0
    %812 = vmatpush1.bf16.msra.mxu0 %v794
    %813 = vmatprep.subr.bf16.mxu0 0
    %814 = vmatpush1.bf16.msra.mxu0 %v795
    %815 = vmatprep.subr.bf16.mxu0 0
    %816 = vmatpush1.bf16.msra.mxu0 %v796
    %817 = vmatprep.subr.bf16.mxu0 0
    %818 = vmatpush1.bf16.msra.mxu0 %v797
    %819 = vmatprep.subr.bf16.mxu0 0
    %820 = vmatpush1.bf16.msra.mxu0 %v798
    %821 = vmatprep.subr.bf16.mxu0 0
    %822 = vmatpush1.bf16.msra.mxu0 %v799
    %823 = vmatprep.subr.bf16.mxu0 0
    %824 = vmatpush1.bf16.msra.mxu0 %v800
    %825 = vmatprep.subr.bf16.mxu0 0
    %826 = vmatpush1.bf16.msra.mxu0 0
    %827 = vmatprep.subr.bf16.mxu0 0
    %828 = vmatpush1.bf16.msra.mxu0 0
    %829 = vmatprep.subr.bf16.mxu0 0
    %830 = vmatpush1.bf16.msra.mxu0 0
    %831 = vmatprep.subr.bf16.mxu0 0
    %832 = vmatpush1.bf16.msra.mxu0 0
    %833 = vmatprep.subr.bf16.mxu0 0
    %834 = vmatpush1.bf16.msra.mxu0 0
    %835 = vmatprep.subr.bf16.mxu0 0
    %836 = vmatpush1.bf16.msra.mxu0 0
    %837 = vmatprep.subr.bf16.mxu0 0
    %838 = vmatpush1.bf16.msra.mxu0 0
    %839 = vmatprep.subr.bf16.mxu0 0
    %840 = vmatpush1.bf16.msra.mxu0 0
    %841 = vmatprep.mubr.bf16.mxu0 0
    %842 = vmatmul.mubr.bf16.gmra.mrb[0].mxu0 %v754
    %v843 = vpop.f32.mrb[0].mxu0
    %v844 = vadd.f32 %v759, %v843
    %v845 = vpop.f32.mrb[0].mxu0
    %v846 = vpop.f32.mrb[0].mxu0
    %v847 = vadd.f32 %v760, %v846
    %v848 = vpop.f32.mrb[0].mxu0
    %849 = vdwg.mxu0
    %v850 = vadd.f32 %v844, %v847
    %v851 = vrot.slane %v850, 4
    %v852 = vadd.f32 %v850, %v851
    %v853 = vrot.slane %v852, 2
    %v854 = vadd.f32 %v852, %v853
    %v855 = vrot.slane %v854, 1
    %v856 = vadd.f32 %v854, %v855
    %v857 = vmul.f32 %v856, 0.0625
    %v858 = vmul.f32 %v844, %v844
    %v859 = vmul.f32 %v847, %v847
    %v860 = vadd.f32 %v858, %v859
    %v861 = vrot.slane %v860, 4
    %v862 = vadd.f32 %v860, %v861
    %v863 = vrot.slane %v862, 2
    %v864 = vadd.f32 %v862, %v863
    %v865 = vrot.slane %v864, 1
    %v866 = vadd.f32 %v864, %v865
    %v867 = vmul.f32 %v866, 0.0625
    %v868 = vmul.f32 %v857, %v857
    %v869 = vsub.f32 %v867, %v868
    %v870 = vmax.f32 %v869, 0.0
    %v871 = vadd.f32 %v870, 1e-05
    %v872 = vrsqrt.pop %v871
    %v873 = vmul.f32 %v711, %v872
    %v874 = vmul.f32 %v857, %v873
    %v876 = vrot.slane %v874, 7
    %v878 = vsub.f32 %v711, %v876
    %v879 = vlaneseq
    %v880 = vshrl.u32 %v879, 7
    %v881 = vsub.s32 1, %v880
    %v882 = vrot.slane %v873, %v881
    %v883 = vmul.f32 %v844, %v882
    %v884 = vmul.f32 %v847, %v882
    %v885 = vlaneseq
    %v886 = vshrl.u32 %v885, 7
    %v887 = vsub.s32 2, %v886
    %v888 = vrot.slane %v878, %v887
    %v889 = vadd.f32 %v883, %v888
    %v890 = vadd.f32 %v884, %v888
    %891 = vst [vmem:[#allocation10] sm:$0xff] %v889
    %892 = vst [vmem:[#allocation10 + $0x8] sm:$0xff] %v890
    // Predicated region
    $region34: #{tpu_custom_call.1} parent=1 // pred_check
      _
    $region35: #{tpu_custom_call.1} parent=1 // pred_check_branch
      %894 = sbr.rel (0) target = $region37
    $region36: #{tpu_custom_call.1} parent=1 // pred_region
      %s896 = ssub.s32 256, 256
      %897 = vsyncadd [#allocation4], %s896
      %s898 = sshll.u32 [#allocation10], 4
      %s899 = int_to_ptr.vmem [resolvable:$true] %s898
      %904 = dma.vmem_to_hbm [thread:$0]  %s899, 256, %s4, [#allocation4], 128, 128, 8
    $region37: #{tpu_custom_call.1} parent=1 // pred_fallthru
      _
    // Predicated region
    $region38: #{tpu_custom_call.1} parent=1 // pred_check
      _
    $region39: #{tpu_custom_call.1} parent=1 // pred_check_branch
      %906 = sbr.rel (0) target = $region41
    $region40: #{tpu_custom_call.1} parent=1 // pred_region
      %907 = dma.done [#allocation4], 256
    $region41: #{tpu_custom_call.1} parent=1 // pred_fallthru
      _
    %908 = vsyncpa [#allocation3], 1
    %909 = vsyncpa [#allocation6], 1
    %910 = vsyncpa [#allocation9], 1
    %911 = vsyncpa [#allocation4], 1

</llo_original>
